<compile_context>
chip_gen: v6e
topology: v6e:2x2x1
jax: 0.10.0
libtpu: 0.0.40
codegen_flags: <defaults>
</compile_context>

<pallas_src>
import jax
import jax.numpy as jnp
from jax import lax
from jax.experimental import pallas as pl
from jax.experimental.pallas import tpu as pltpu

EPS = 1e-5  # PyTorch GroupNorm default eps


def _gn_relu(h, gamma, beta, inv_p):
    """Single-pass GroupNorm(num_groups == C) over the lane (pixel) axis + ReLU.

    h: (C, P) f32, gamma/beta: (C, 1) f32.
    """
    s1 = jnp.sum(h, axis=-1, keepdims=True)
    s2 = jnp.sum(h * h, axis=-1, keepdims=True)
    mu = s1 * inv_p
    var = jnp.maximum(s2 * inv_p - mu * mu, 0.0)
    scale = gamma * lax.rsqrt(var + EPS)      # EUP
    shift = beta - mu * scale
    return jnp.maximum(h * scale + shift, 0.0)


def affinity_kernel(objs_ref, dets_ref, w1_ref, w2_ref, w3_ref, p_ref, out_ref):
    D, N = objs_ref.shape
    _, M = dets_ref.shape
    P = N * M
    Dq = w3_ref.shape[0]
    inv_p = 1.0 / float(P)

    # ---- build the (D, P) affinity tensor, channels-first, with p = n*M + m ----
    # Selection matrices built from iota compares only (no int div/mod, no
    # reshapes): E[n,p] = [p // M == n], F[m,p] = [p % M == m].
    n_row = lax.broadcasted_iota(jnp.int32, (N, P), 0)
    p_col = lax.broadcasted_iota(jnp.int32, (N, P), 1)
    start = n_row * M
    e_mask = (p_col >= start) & (p_col < start + M)
    e_mat = e_mask.astype(jnp.float32)                                   # (N, P)
    n_of_p = jnp.sum(e_mat * n_row.astype(jnp.float32), axis=0,
                     keepdims=True)                                      # (1, P) = p // M
    p_lane = lax.broadcasted_iota(jnp.int32, (1, P), 1).astype(jnp.float32)
    m_of_p = p_lane - n_of_p * M                                         # (1, P) = p %  M
    m_row = lax.broadcasted_iota(jnp.int32, (M, P), 0).astype(jnp.float32)
    f_mat = (m_row == m_of_p).astype(jnp.float32)                        # (M, P)

    obj_rep = jnp.dot(objs_ref[...], e_mat, preferred_element_type=jnp.float32)  # (D, P)
    det_rep = jnp.dot(dets_ref[...], f_mat, preferred_element_type=jnp.float32)  # (D, P)
    x = obj_rep * det_rep                    # batch_multiply affinity, (D, P)

    # ---- conv1 stack (weights are (C_out, C_in); GN-cancelled biases omitted) ----
    h = jnp.dot(w1_ref[...], x, preferred_element_type=jnp.float32)      # (D, P)
    h = _gn_relu(h, p_ref[:, 0:1], p_ref[:, 1:2], inv_p)
    h = jnp.dot(w2_ref[...], h, preferred_element_type=jnp.float32)      # (D, P)
    h = _gn_relu(h, p_ref[:, 2:3], p_ref[:, 3:4], inv_p)
    h = jnp.dot(w3_ref[...], h, preferred_element_type=jnp.float32)      # (Dq, P)
    h = _gn_relu(h, p_ref[0:Dq, 4:5], p_ref[0:Dq, 5:6], inv_p)

    # final 1x1 conv (Dq -> 1): VPU multiply + sublane reduce, lane-dense output
    out = jnp.sum(h * p_ref[0:Dq, 6:7], axis=0, keepdims=True) + p_ref[0:1, 7:8]
    out_ref[...] = out                                                   # (1, P)


def init_params(key, in_channels):
    """Deterministic synthetic parameters matching the module's shapes.

    Weights stored channels-first as (C_out, C_in).  b1/b2/b3 are created only so
    the reference can prove they cancel under GroupNorm; the kernel never sees them.
    """
    D = in_channels
    Dq = in_channels // 4
    ks = jax.random.split(key, 16)

    def conv_w(k, cout, cin):
        return jax.random.normal(k, (cout, cin), jnp.float32) / jnp.sqrt(cin)

    def vec(k, c, scale=0.1):
        return scale * jax.random.normal(k, (c,), jnp.float32)

    return dict(
        w1=conv_w(ks[0], D, D),   b1=vec(ks[1], D),
        g1=1.0 + vec(ks[2], D),   be1=vec(ks[3], D),
        w2=conv_w(ks[4], D, D),   b2=vec(ks[5], D),
        g2=1.0 + vec(ks[6], D),   be2=vec(ks[7], D),
        w3=conv_w(ks[8], Dq, D),  b3=vec(ks[9], Dq),
        g3=1.0 + vec(ks[10], Dq), be3=vec(ks[11], Dq),
        w4=conv_w(ks[12], 1, Dq)[0],                  # (Dq,)
        b4=0.1 * jax.random.normal(ks[13], (), jnp.float32),
    )


@jax.jit
def affinity_forward(objs, dets, params):
    """objs: (1, D, N), dets: (1, D, M) float32 -> (1, 1, N, M) float32."""
    _, D, N = objs.shape
    M = dets.shape[2]
    Dq = D // 4
    P = N * M

    # pack all small per-channel vectors into one (D, 8) array -> single DMA
    pvec = jnp.zeros((D, 8), jnp.float32)
    pvec = pvec.at[:, 0].set(params["g1"])
    pvec = pvec.at[:, 1].set(params["be1"])
    pvec = pvec.at[:, 2].set(params["g2"])
    pvec = pvec.at[:, 3].set(params["be2"])
    pvec = pvec.at[:Dq, 4].set(params["g3"])
    pvec = pvec.at[:Dq, 5].set(params["be3"])
    pvec = pvec.at[:Dq, 6].set(params["w4"])
    pvec = pvec.at[0, 7].set(params["b4"])

    vmem = pl.BlockSpec(memory_space=pltpu.MemorySpace.VMEM)
    out = pl.pallas_call(
        affinity_kernel,
        out_shape=jax.ShapeDtypeStruct((1, P), jnp.float32),
        in_specs=[vmem] * 6,
        out_specs=vmem,
    )(objs[0], dets[0], params["w1"], params["w2"], params["w3"], pvec)
    return out.reshape(1, 1, N, M)


def affinity_reference(objs, dets, params):
    """Pure-JAX f32 reference with the full PyTorch semantics (incl. b1/b2/b3)."""
    _, D, N = objs.shape
    M = dets.shape[2]
    o, d = objs[0], dets[0]
    x = (o[:, :, None] * d[:, None, :]).reshape(D, N * M)          # (D, P), p = n*M + m

    def gn_relu(h, g, b):
        mu = jnp.mean(h, axis=1, keepdims=True)
        var = jnp.mean((h - mu) ** 2, axis=1, keepdims=True)
        hn = (h - mu) / jnp.sqrt(var + EPS)
        return jnp.maximum(hn * g[:, None] + b[:, None], 0.0)

    h = params["w1"] @ x + params["b1"][:, None]
    h = gn_relu(h, params["g1"], params["be1"])
    h = params["w2"] @ h + params["b2"][:, None]
    h = gn_relu(h, params["g2"], params["be2"])
    h = params["w3"] @ h + params["b3"][:, None]
    h = gn_relu(h, params["g3"], params["be3"])
    out = params["w4"][None, :] @ h + params["b4"]
    return out.reshape(1, 1, N, M)


if __name__ == "__main__":
    # small shapes: in_channels D = 32, N = 8 tracked objects, M = 16 detections
    D, N, M = 32, 8, 16
    key = jax.random.PRNGKey(0)
    k_obj, k_det, k_param = jax.random.split(key, 3)

    objs = jax.random.normal(k_obj, (1, D, N), jnp.float32)   # 1 x D x N
    dets = jax.random.normal(k_det, (1, D, M), jnp.float32)   # 1 x D x M
    params = init_params(k_param, D)

    out = affinity_forward(objs, dets, params)
    out = jax.block_until_ready(out)
    assert out.shape == (1, 1, N, M), out.shape

    ref = affinity_reference(objs, dets, params)
    assert bool(jnp.allclose(out, ref, rtol=1e-3, atol=1e-3)), (
        float(jnp.max(jnp.abs(out - ref))))

    print("KERNEL_OK")
</pallas_src>

<mosaic_0001>
module attributes {stable_mosaic.version = 11 : i64} {
  func.func @affinity_kernel(%arg0: memref<32x8xf32, #tpu.memory_space<vmem>>, %arg1: memref<32x16xf32, #tpu.memory_space<vmem>>, %arg2: memref<32x32xf32, #tpu.memory_space<vmem>>, %arg3: memref<32x32xf32, #tpu.memory_space<vmem>>, %arg4: memref<8x32xf32, #tpu.memory_space<vmem>>, %arg5: memref<32x8xf32, #tpu.memory_space<vmem>>, %arg6: memref<1x128xf32, #tpu.memory_space<vmem>>) attributes {dimension_semantics = [], scalar_prefetch = 0 : i64, scratch_operands = 0 : i64, tpu.core_type = #tpu.core_type<tc>} {
    %0 = tpu.iota {dimensions = array<i32: 0>} : vector<8x128xi32>
    %1 = tpu.iota {dimensions = array<i32: 1>} : vector<8x128xi32>
    %c16_i32 = arith.constant 16 : i32
    %2 = vector.broadcast %c16_i32 : i32 to vector<8x128xi32>
    %3 = arith.muli %0, %2 : vector<8x128xi32>
    %4 = arith.cmpi sge, %1, %3 : vector<8x128xi32>
    %c16_i32_0 = arith.constant 16 : i32
    %5 = vector.broadcast %c16_i32_0 : i32 to vector<8x128xi32>
    %6 = arith.addi %3, %5 : vector<8x128xi32>
    %7 = arith.cmpi slt, %1, %6 : vector<8x128xi32>
    %8 = arith.andi %4, %7 : vector<8x128xi1>
    %9 = arith.extui %8 : vector<8x128xi1> to vector<8x128xi32>
    %10 = arith.sitofp %9 : vector<8x128xi32> to vector<8x128xf32>
    %11 = arith.sitofp %0 : vector<8x128xi32> to vector<8x128xf32>
    %12 = arith.mulf %10, %11 : vector<8x128xf32>
    %cst = arith.constant dense<0.000000e+00> : vector<128xf32>
    %13 = vector.multi_reduction <add>, %12, %cst [0] : vector<8x128xf32> to vector<128xf32>
    %14 = vector.shape_cast %13 : vector<128xf32> to vector<1x128xf32>
    %15 = tpu.iota {dimensions = array<i32: 1>} : vector<1x128xi32>
    %16 = arith.sitofp %15 : vector<1x128xi32> to vector<1x128xf32>
    %cst_1 = arith.constant 1.600000e+01 : f32
    %17 = vector.broadcast %cst_1 : f32 to vector<1x128xf32>
    %18 = arith.mulf %14, %17 : vector<1x128xf32>
    %19 = arith.subf %16, %18 : vector<1x128xf32>
    %20 = tpu.iota {dimensions = array<i32: 0>} : vector<16x128xi32>
    %21 = arith.sitofp %20 : vector<16x128xi32> to vector<16x128xf32>
    %22 = vector.broadcast %19 : vector<1x128xf32> to vector<16x128xf32>
    %23 = arith.cmpf oeq, %21, %22 : vector<16x128xf32>
    %24 = arith.extui %23 : vector<16x128xi1> to vector<16x128xi32>
    %25 = arith.sitofp %24 : vector<16x128xi32> to vector<16x128xf32>
    %c0 = arith.constant 0 : index
    %c0_2 = arith.constant 0 : index
    %26 = vector.load %arg0[%c0, %c0_2] : memref<32x8xf32, #tpu.memory_space<vmem>>, vector<32x8xf32>
    %cst_3 = arith.constant dense<0.000000e+00> : vector<32x128xf32>
    %27 = tpu.matmul %26, %10, %cst_3 {dimension_numbers = #tpu.dot_dimension_numbers<[1], [0], [0], [1], [0, 0, 1, 1], [], []>} : vector<32x8xf32>, vector<8x128xf32>, vector<32x128xf32> -> vector<32x128xf32>
    %c0_4 = arith.constant 0 : index
    %c0_5 = arith.constant 0 : index
    %28 = vector.load %arg1[%c0_4, %c0_5] : memref<32x16xf32, #tpu.memory_space<vmem>>, vector<32x16xf32>
    %cst_6 = arith.constant dense<0.000000e+00> : vector<32x128xf32>
    %29 = tpu.matmul %28, %25, %cst_6 {dimension_numbers = #tpu.dot_dimension_numbers<[1], [0], [0], [1], [0, 0, 1, 1], [], []>} : vector<32x16xf32>, vector<16x128xf32>, vector<32x128xf32> -> vector<32x128xf32>
    %30 = arith.mulf %27, %29 : vector<32x128xf32>
    %c0_7 = arith.constant 0 : index
    %c0_8 = arith.constant 0 : index
    %31 = vector.load %arg2[%c0_7, %c0_8] : memref<32x32xf32, #tpu.memory_space<vmem>>, vector<32x32xf32>
    %cst_9 = arith.constant dense<0.000000e+00> : vector<32x128xf32>
    %32 = tpu.matmul %31, %30, %cst_9 {dimension_numbers = #tpu.dot_dimension_numbers<[1], [0], [0], [1], [0, 0, 1, 1], [], []>} : vector<32x32xf32>, vector<32x128xf32>, vector<32x128xf32> -> vector<32x128xf32>
    %c0_10 = arith.constant 0 : index
    %c0_11 = arith.constant 0 : index
    %33 = vector.load %arg5[%c0_10, %c0_11] : memref<32x8xf32, #tpu.memory_space<vmem>>, vector<32x1xf32>
    %c0_12 = arith.constant 0 : index
    %c1 = arith.constant 1 : index
    %34 = vector.load %arg5[%c0_12, %c1] : memref<32x8xf32, #tpu.memory_space<vmem>>, vector<32x1xf32>
    %cst_13 = arith.constant dense<0.000000e+00> : vector<32xf32>
    %35 = vector.multi_reduction <add>, %32, %cst_13 [1] : vector<32x128xf32> to vector<32xf32>
    %36 = vector.shape_cast %35 : vector<32xf32> to vector<32x1xf32>
    %37 = arith.mulf %32, %32 : vector<32x128xf32>
    %cst_14 = arith.constant dense<0.000000e+00> : vector<32xf32>
    %38 = vector.multi_reduction <add>, %37, %cst_14 [1] : vector<32x128xf32> to vector<32xf32>
    %39 = vector.shape_cast %38 : vector<32xf32> to vector<32x1xf32>
    %cst_15 = arith.constant 7.812500e-03 : f32
    %40 = vector.broadcast %cst_15 : f32 to vector<32x1xf32>
    %41 = arith.mulf %36, %40 : vector<32x1xf32>
    %cst_16 = arith.constant 7.812500e-03 : f32
    %42 = vector.broadcast %cst_16 : f32 to vector<32x1xf32>
    %43 = arith.mulf %39, %42 : vector<32x1xf32>
    %44 = arith.mulf %41, %41 : vector<32x1xf32>
    %45 = arith.subf %43, %44 : vector<32x1xf32>
    %cst_17 = arith.constant 0.000000e+00 : f32
    %46 = vector.broadcast %cst_17 : f32 to vector<32x1xf32>
    %47 = arith.maximumf %45, %46 : vector<32x1xf32>
    %cst_18 = arith.constant 9.99999974E-6 : f32
    %48 = vector.broadcast %cst_18 : f32 to vector<32x1xf32>
    %49 = arith.addf %47, %48 : vector<32x1xf32>
    %50 = math.rsqrt %49 : vector<32x1xf32>
    %51 = arith.mulf %33, %50 : vector<32x1xf32>
    %52 = arith.mulf %41, %51 : vector<32x1xf32>
    %53 = arith.subf %34, %52 : vector<32x1xf32>
    %54 = vector.broadcast %51 : vector<32x1xf32> to vector<32x128xf32>
    %55 = arith.mulf %32, %54 : vector<32x128xf32>
    %56 = vector.broadcast %53 : vector<32x1xf32> to vector<32x128xf32>
    %57 = arith.addf %55, %56 : vector<32x128xf32>
    %cst_19 = arith.constant 0.000000e+00 : f32
    %58 = vector.broadcast %cst_19 : f32 to vector<32x128xf32>
    %59 = arith.maximumf %57, %58 : vector<32x128xf32>
    %c0_20 = arith.constant 0 : index
    %c0_21 = arith.constant 0 : index
    %60 = vector.load %arg3[%c0_20, %c0_21] : memref<32x32xf32, #tpu.memory_space<vmem>>, vector<32x32xf32>
    %cst_22 = arith.constant dense<0.000000e+00> : vector<32x128xf32>
    %61 = tpu.matmul %60, %59, %cst_22 {dimension_numbers = #tpu.dot_dimension_numbers<[1], [0], [0], [1], [0, 0, 1, 1], [], []>} : vector<32x32xf32>, vector<32x128xf32>, vector<32x128xf32> -> vector<32x128xf32>
    %c0_23 = arith.constant 0 : index
    %c2 = arith.constant 2 : index
    %62 = vector.load %arg5[%c0_23, %c2] : memref<32x8xf32, #tpu.memory_space<vmem>>, vector<32x1xf32>
    %c0_24 = arith.constant 0 : index
    %c3 = arith.constant 3 : index
    %63 = vector.load %arg5[%c0_24, %c3] : memref<32x8xf32, #tpu.memory_space<vmem>>, vector<32x1xf32>
    %cst_25 = arith.constant dense<0.000000e+00> : vector<32xf32>
    %64 = vector.multi_reduction <add>, %61, %cst_25 [1] : vector<32x128xf32> to vector<32xf32>
    %65 = vector.shape_cast %64 : vector<32xf32> to vector<32x1xf32>
    %66 = arith.mulf %61, %61 : vector<32x128xf32>
    %cst_26 = arith.constant dense<0.000000e+00> : vector<32xf32>
    %67 = vector.multi_reduction <add>, %66, %cst_26 [1] : vector<32x128xf32> to vector<32xf32>
    %68 = vector.shape_cast %67 : vector<32xf32> to vector<32x1xf32>
    %cst_27 = arith.constant 7.812500e-03 : f32
    %69 = vector.broadcast %cst_27 : f32 to vector<32x1xf32>
    %70 = arith.mulf %65, %69 : vector<32x1xf32>
    %cst_28 = arith.constant 7.812500e-03 : f32
    %71 = vector.broadcast %cst_28 : f32 to vector<32x1xf32>
    %72 = arith.mulf %68, %71 : vector<32x1xf32>
    %73 = arith.mulf %70, %70 : vector<32x1xf32>
    %74 = arith.subf %72, %73 : vector<32x1xf32>
    %cst_29 = arith.constant 0.000000e+00 : f32
    %75 = vector.broadcast %cst_29 : f32 to vector<32x1xf32>
    %76 = arith.maximumf %74, %75 : vector<32x1xf32>
    %cst_30 = arith.constant 9.99999974E-6 : f32
    %77 = vector.broadcast %cst_30 : f32 to vector<32x1xf32>
    %78 = arith.addf %76, %77 : vector<32x1xf32>
    %79 = math.rsqrt %78 : vector<32x1xf32>
    %80 = arith.mulf %62, %79 : vector<32x1xf32>
    %81 = arith.mulf %70, %80 : vector<32x1xf32>
    %82 = arith.subf %63, %81 : vector<32x1xf32>
    %83 = vector.broadcast %80 : vector<32x1xf32> to vector<32x128xf32>
    %84 = arith.mulf %61, %83 : vector<32x128xf32>
    %85 = vector.broadcast %82 : vector<32x1xf32> to vector<32x128xf32>
    %86 = arith.addf %84, %85 : vector<32x128xf32>
    %cst_31 = arith.constant 0.000000e+00 : f32
    %87 = vector.broadcast %cst_31 : f32 to vector<32x128xf32>
    %88 = arith.maximumf %86, %87 : vector<32x128xf32>
    %c0_32 = arith.constant 0 : index
    %c0_33 = arith.constant 0 : index
    %89 = vector.load %arg4[%c0_32, %c0_33] : memref<8x32xf32, #tpu.memory_space<vmem>>, vector<8x32xf32>
    %cst_34 = arith.constant dense<0.000000e+00> : vector<8x128xf32>
    %90 = tpu.matmul %89, %88, %cst_34 {dimension_numbers = #tpu.dot_dimension_numbers<[1], [0], [0], [1], [0, 0, 1, 1], [], []>} : vector<8x32xf32>, vector<32x128xf32>, vector<8x128xf32> -> vector<8x128xf32>
    %c0_35 = arith.constant 0 : index
    %c4 = arith.constant 4 : index
    %91 = vector.load %arg5[%c0_35, %c4] : memref<32x8xf32, #tpu.memory_space<vmem>>, vector<8x1xf32>
    %c0_36 = arith.constant 0 : index
    %c5 = arith.constant 5 : index
    %92 = vector.load %arg5[%c0_36, %c5] : memref<32x8xf32, #tpu.memory_space<vmem>>, vector<8x1xf32>
    %cst_37 = arith.constant dense<0.000000e+00> : vector<8xf32>
    %93 = vector.multi_reduction <add>, %90, %cst_37 [1] : vector<8x128xf32> to vector<8xf32>
    %94 = vector.shape_cast %93 : vector<8xf32> to vector<8x1xf32>
    %95 = arith.mulf %90, %90 : vector<8x128xf32>
    %cst_38 = arith.constant dense<0.000000e+00> : vector<8xf32>
    %96 = vector.multi_reduction <add>, %95, %cst_38 [1] : vector<8x128xf32> to vector<8xf32>
    %97 = vector.shape_cast %96 : vector<8xf32> to vector<8x1xf32>
    %cst_39 = arith.constant 7.812500e-03 : f32
    %98 = vector.broadcast %cst_39 : f32 to vector<8x1xf32>
    %99 = arith.mulf %94, %98 : vector<8x1xf32>
    %cst_40 = arith.constant 7.812500e-03 : f32
    %100 = vector.broadcast %cst_40 : f32 to vector<8x1xf32>
    %101 = arith.mulf %97, %100 : vector<8x1xf32>
    %102 = arith.mulf %99, %99 : vector<8x1xf32>
    %103 = arith.subf %101, %102 : vector<8x1xf32>
    %cst_41 = arith.constant 0.000000e+00 : f32
    %104 = vector.broadcast %cst_41 : f32 to vector<8x1xf32>
    %105 = arith.maximumf %103, %104 : vector<8x1xf32>
    %cst_42 = arith.constant 9.99999974E-6 : f32
    %106 = vector.broadcast %cst_42 : f32 to vector<8x1xf32>
    %107 = arith.addf %105, %106 : vector<8x1xf32>
    %108 = math.rsqrt %107 : vector<8x1xf32>
    %109 = arith.mulf %91, %108 : vector<8x1xf32>
    %110 = arith.mulf %99, %109 : vector<8x1xf32>
    %111 = arith.subf %92, %110 : vector<8x1xf32>
    %112 = vector.broadcast %109 : vector<8x1xf32> to vector<8x128xf32>
    %113 = arith.mulf %90, %112 : vector<8x128xf32>
    %114 = vector.broadcast %111 : vector<8x1xf32> to vector<8x128xf32>
    %115 = arith.addf %113, %114 : vector<8x128xf32>
    %cst_43 = arith.constant 0.000000e+00 : f32
    %116 = vector.broadcast %cst_43 : f32 to vector<8x128xf32>
    %117 = arith.maximumf %115, %116 : vector<8x128xf32>
    %c0_44 = arith.constant 0 : index
    %c6 = arith.constant 6 : index
    %118 = vector.load %arg5[%c0_44, %c6] : memref<32x8xf32, #tpu.memory_space<vmem>>, vector<8x1xf32>
    %119 = vector.broadcast %118 : vector<8x1xf32> to vector<8x128xf32>
    %120 = arith.mulf %117, %119 : vector<8x128xf32>
    %cst_45 = arith.constant dense<0.000000e+00> : vector<128xf32>
    %121 = vector.multi_reduction <add>, %120, %cst_45 [0] : vector<8x128xf32> to vector<128xf32>
    %122 = vector.shape_cast %121 : vector<128xf32> to vector<1x128xf32>
    %c0_46 = arith.constant 0 : index
    %c7 = arith.constant 7 : index
    %123 = vector.load %arg5[%c0_46, %c7] : memref<32x8xf32, #tpu.memory_space<vmem>>, vector<1x1xf32>
    %124 = vector.broadcast %123 : vector<1x1xf32> to vector<1x128xf32>
    %125 = arith.addf %122, %124 : vector<1x128xf32>
    %c0_47 = arith.constant 0 : index
    %c0_48 = arith.constant 0 : index
    %126 = vector.load %arg6[%c0_47, %c0_48] : memref<1x128xf32, #tpu.memory_space<vmem>>, vector<1x128xf32>
    tpu.vector_store %arg6[%c0_47, %c0_48], %125 {strides = array<i32>} : memref<1x128xf32, #tpu.memory_space<vmem>>, vector<1x128xf32>,
    return
  }
}

</mosaic_0001>

<llo_original>
// kernel: affinity_forward.1
$region0: #{affinity_forward.1}
  #allocation0 [shape = 'u32[]', space=smem, size = 0x4, offset = 0x4, fixed_abs, tag = 'smem constant byte address 0x4 - core index']
  #allocation1 [shape = 'u32[144,128]{1,0:T(1,128)}', space=vmem, size = 0x12000, scoped, tag = 'internal scratch']
  %s0 = inlined_call_operand.vmem [shape: f32[32,8], index: 0, kind: input, shape index: {}]
  %s1 = inlined_call_operand.vmem [shape: f32[32,16], index: 1, kind: input, shape index: {}]
  %s2 = inlined_call_operand.vmem [shape: f32[32,32], index: 2, kind: input, shape index: {}]
  %s3 = inlined_call_operand.vmem [shape: f32[32,32], index: 3, kind: input, shape index: {}]
  %s4 = inlined_call_operand.vmem [shape: f32[8,32], index: 4, kind: input, shape index: {}]
  %s5 = inlined_call_operand.vmem [shape: f32[32,8], index: 5, kind: input, shape index: {}]
  %s6 = inlined_call_operand.vmem [shape: f32[1,128], index: 6, kind: output, shape index: {}]
  %s7 = sld [smem:[#allocation0]]
  $region34: #{affinity_forward.1} parent=0
    _
  %s9 = ssub.s32 1, %s7
  %s10 = scalar_select 0, %s9, %s7
  // Predicated region
  $region2: #{affinity_forward.1} parent=0 // pred_check
    _
  $region3: #{affinity_forward.1} parent=0 // pred_check_branch
    %12 = sbr.rel (0) target = $region5
  $region4: #{affinity_forward.1} parent=0 // pred_region
    _
  $region5: #{affinity_forward.1} parent=0 // pred_fallthru
    _
  // Predicated region
  $region6: #{affinity_forward.1} parent=0 // pred_check
    _
  $region7: #{affinity_forward.1} parent=0 // pred_check_branch
    %14 = sbr.rel (0) target = $region9
  $region8: #{affinity_forward.1} parent=0 // pred_region
    _
  $region9: #{affinity_forward.1} parent=0 // pred_fallthru
    _
  // Predicated region
  $region10: #{affinity_forward.1} parent=0 // pred_check
    _
  $region11: #{affinity_forward.1} parent=0 // pred_check_branch
    %16 = sbr.rel (0) target = $region13
  $region12: #{affinity_forward.1} parent=0 // pred_region
    _
  $region13: #{affinity_forward.1} parent=0 // pred_fallthru
    _
  // Predicated region
  $region14: #{affinity_forward.1} parent=0 // pred_check
    _
  $region15: #{affinity_forward.1} parent=0 // pred_check_branch
    %18 = sbr.rel (0) target = $region17
  $region16: #{affinity_forward.1} parent=0 // pred_region
    _
  $region17: #{affinity_forward.1} parent=0 // pred_fallthru
    _
  // Predicated region
  $region18: #{affinity_forward.1} parent=0 // pred_check
    _
  $region19: #{affinity_forward.1} parent=0 // pred_check_branch
    %20 = sbr.rel (0) target = $region21
  $region20: #{affinity_forward.1} parent=0 // pred_region
    _
  $region21: #{affinity_forward.1} parent=0 // pred_fallthru
    _
  // Predicated region
  $region22: #{affinity_forward.1} parent=0 // pred_check
    _
  $region23: #{affinity_forward.1} parent=0 // pred_check_branch
    %22 = sbr.rel (0) target = $region25
  $region24: #{affinity_forward.1} parent=0 // pred_region
    _
  $region25: #{affinity_forward.1} parent=0 // pred_fallthru
    _
  %v23 = vlaneseq
  %v24 = vshrl.u32 %v23, 7
  %v25 = vlaneseq
  %v26 = vand.u32 %v25, 127
  %v27 = vmul.u32 %v24, 16
  %vm28 = vcmp.ge.s32.totalorder %v26, %v27
  %v29 = vadd.s32 %v27, 16
  %vm30 = vcmp.lt.s32.totalorder %v26, %v29
  %vm31 = vmand %vm28, %vm30
  %v32 = vsel %vm31, 1, 0
  %v33 = vcvt.s32.f32 %v32
  %v34 = vcvt.s32.f32 %v24
  %v35 = vmul.f32 %v33, %v34
  %v36 = vrot.slane %v35, 4
  %v37 = vadd.f32 %v35, %v36
  %v38 = vrot.slane %v37, 2
  %v39 = vadd.f32 %v37, %v38
  %v40 = vrot.slane %v39, 1
  %v41 = vadd.f32 %v39, %v40
  %v42 = vcvt.s32.f32 %v26
  %v43 = vmul.f32 %v41, 16.0
  %v44 = vsub.f32 %v42, %v43
  %v45 = vadd.s32 %v24, 8
  %v46 = vcvt.s32.f32 %v45
  %vm47 = vcmp.eq.f32.partialorder %v34, %v44
  %vm48 = vcmp.eq.f32.partialorder %v46, %v44
  %v49 = vsel %vm47, 1, 0
  %v50 = vsel %vm48, 1, 0
  %v51 = vcvt.s32.f32 %v49
  %v52 = vcvt.s32.f32 %v50
  %v53 = vld [vmem:[%s0] sm:$0xff]
  %v54 = vld [vmem:[%s0 + $0x8] sm:$0xff]
  %v55 = vld [vmem:[%s0 + $0x10] sm:$0xff]
  %v56 = vld [vmem:[%s0 + $0x18] sm:$0xff]
  %vm57 = vcmask 64512
  %v59 = vsel %vm57, %v53, 0
  %v62 = vsel %vm57, %v54, 0
  %v65 = vsel %vm57, %v55, 0
  %v68 = vsel %vm57, %v56, 0
  %70 = vmatprep.subr.mxu0 0.0
  %71 = vmatpush1.msra.mxu0 0.0
  %72 = vmatprep.subr.mxu0 0.0
  %73 = vmatpush1.msra.mxu0 0.0
  %74 = vmatprep.subr.mxu0 0.0
  %75 = vmatpush1.msra.mxu0 0.0
  %76 = vmatprep.subr.mxu0 0.0
  %77 = vmatpush1.msra.mxu0 0.0
  %78 = vmatprep.subr.mxu0 0.0
  %79 = vmatpush1.msra.mxu0 0.0
  %80 = vmatprep.subr.mxu0 0.0
  %81 = vmatpush1.msra.mxu0 0.0
  %82 = vmatprep.subr.mxu0 0.0
  %83 = vmatpush1.msra.mxu0 0.0
  %84 = vmatprep.subr.mxu0 0.0
  %85 = vmatpush1.msra.mxu0 0.0
  %86 = vmatprep.subr.mxu0 0.0
  %87 = vmatpush1.msra.mxu0 0.0
  %88 = vmatprep.subr.mxu0 0.0
  %89 = vmatpush1.msra.mxu0 0.0
  %90 = vmatprep.subr.mxu0 0.0
  %91 = vmatpush1.msra.mxu0 0.0
  %92 = vmatprep.subr.mxu0 0.0
  %93 = vmatpush1.msra.mxu0 0.0
  %94 = vmatprep.subr.mxu0 0.0
  %95 = vmatpush1.msra.mxu0 0.0
  %96 = vmatprep.subr.mxu0 0.0
  %97 = vmatpush1.msra.mxu0 0.0
  %98 = vmatprep.subr.mxu0 0.0
  %99 = vmatpush1.msra.mxu0 0.0
  %100 = vmatprep.subr.mxu0 0.0
  %101 = vmatpush1.msra.mxu0 %v33
  %102 = vmatprep.subr.mxu0 0.0
  %103 = vmatpush2.msra.mxu0 0.0
  %104 = vmatprep.subr.mxu0 0.0
  %105 = vmatpush2.msra.mxu0 0.0
  %106 = vmatprep.subr.mxu0 0.0
  %107 = vmatpush2.msra.mxu0 0.0
  %108 = vmatprep.subr.mxu0 0.0
  %109 = vmatpush2.msra.mxu0 0.0
  %110 = vmatprep.subr.mxu0 0.0
  %111 = vmatpush2.msra.mxu0 0.0
  %112 = vmatprep.subr.mxu0 0.0
  %113 = vmatpush2.msra.mxu0 0.0
  %114 = vmatprep.subr.mxu0 0.0
  %115 = vmatpush2.msra.mxu0 0.0
  %116 = vmatprep.subr.mxu0 0.0
  %117 = vmatpush2.msra.mxu0 0.0
  %118 = vmatprep.subr.mxu0 0.0
  %119 = vmatpush2.msra.mxu0 0.0
  %120 = vmatprep.subr.mxu0 0.0
  %121 = vmatpush2.msra.mxu0 0.0
  %122 = vmatprep.subr.mxu0 0.0
  %123 = vmatpush2.msra.mxu0 0.0
  %124 = vmatprep.subr.mxu0 0.0
  %125 = vmatpush2.msra.mxu0 0.0
  %126 = vmatprep.subr.mxu0 0.0
  %127 = vmatpush2.msra.mxu0 0.0
  %128 = vmatprep.subr.mxu0 0.0
  %129 = vmatpush2.msra.mxu0 0.0
  %130 = vmatprep.subr.mxu0 0.0
  %131 = vmatpush2.msra.mxu0 0.0
  %132 = vmatprep.subr.mxu0 0.0
  %133 = vmatpush2.msra.mxu0 0.0
  %134 = vmatprep.mubr.f32.mxu0 0.0
  %135 = vmatmul.mubr.f32.gmra.mxu0 %v59
  %v136 = vpop.f32.mrf.mxu0
  %v137 = vadd.f32 0.0, %v136
  %v138 = vpop.f32.mrf.mxu0
  %139 = vmatprep.mubr.f32.mxu0 0.0
  %140 = vmatmul.mubr.f32.gmra.mxu0 %v62
  %v141 = vpop.f32.mrf.mxu0
  %v142 = vadd.f32 0.0, %v141
  %v143 = vpop.f32.mrf.mxu0
  %144 = vmatprep.mubr.f32.mxu0 0.0
  %145 = vmatmul.mubr.f32.gmra.mxu0 %v65
  %v146 = vpop.f32.mrf.mxu0
  %v147 = vadd.f32 0.0, %v146
  %v148 = vpop.f32.mrf.mxu0
  %149 = vmatprep.mubr.f32.mxu0 0.0
  %150 = vmatmul.mubr.f32.gmra.mxu0 %v68
  %v151 = vpop.f32.mrf.mxu0
  %v152 = vadd.f32 0.0, %v151
  %v153 = vpop.f32.mrf.mxu0
  %154 = vdwg.mxu0
  %v155 = vld [vmem:[%s1] sm:$0xff]
  %v156 = vld [vmem:[%s1 + $0x8] sm:$0xff]
  %v157 = vld [vmem:[%s1 + $0x10] sm:$0xff]
  %v158 = vld [vmem:[%s1 + $0x18] sm:$0xff]
  %vm159 = vcmask 130048
  %v161 = vsel %vm159, %v155, 0
  %v164 = vsel %vm159, %v156, 0
  %v167 = vsel %vm159, %v157, 0
  %v170 = vsel %vm159, %v158, 0
  %172 = vmatprep.subr.mxu0 0.0
  %173 = vmatpush1.msra.mxu0 0.0
  %174 = vmatprep.subr.mxu0 0.0
  %175 = vmatpush1.msra.mxu0 0.0
  %176 = vmatprep.subr.mxu0 0.0
  %177 = vmatpush1.msra.mxu0 0.0
  %178 = vmatprep.subr.mxu0 0.0
  %179 = vmatpush1.msra.mxu0 0.0
  %180 = vmatprep.subr.mxu0 0.0
  %181 = vmatpush1.msra.mxu0 0.0
  %182 = vmatprep.subr.mxu0 0.0
  %183 = vmatpush1.msra.mxu0 0.0
  %184 = vmatprep.subr.mxu0 0.0
  %185 = vmatpush1.msra.mxu0 0.0
  %186 = vmatprep.subr.mxu0 0.0
  %187 = vmatpush1.msra.mxu0 0.0
  %188 = vmatprep.subr.mxu0 0.0
  %189 = vmatpush1.msra.mxu0 0.0
  %190 = vmatprep.subr.mxu0 0.0
  %191 = vmatpush1.msra.mxu0 0.0
  %192 = vmatprep.subr.mxu0 0.0
  %193 = vmatpush1.msra.mxu0 0.0
  %194 = vmatprep.subr.mxu0 0.0
  %195 = vmatpush1.msra.mxu0 0.0
  %196 = vmatprep.subr.mxu0 0.0
  %197 = vmatpush1.msra.mxu0 0.0
  %198 = vmatprep.subr.mxu0 0.0
  %199 = vmatpush1.msra.mxu0 0.0
  %200 = vmatprep.subr.mxu0 0.0
  %201 = vmatpush1.msra.mxu0 %v52
  %202 = vmatprep.subr.mxu0 0.0
  %203 = vmatpush1.msra.mxu0 %v51
  %204 = vmatprep.subr.mxu0 0.0
  %205 = vmatpush2.msra.mxu0 0.0
  %206 = vmatprep.subr.mxu0 0.0
  %207 = vmatpush2.msra.mxu0 0.0
  %208 = vmatprep.subr.mxu0 0.0
  %209 = vmatpush2.msra.mxu0 0.0
  %210 = vmatprep.subr.mxu0 0.0
  %211 = vmatpush2.msra.mxu0 0.0
  %212 = vmatprep.subr.mxu0 0.0
  %213 = vmatpush2.msra.mxu0 0.0
  %214 = vmatprep.subr.mxu0 0.0
  %215 = vmatpush2.msra.mxu0 0.0
  %216 = vmatprep.subr.mxu0 0.0
  %217 = vmatpush2.msra.mxu0 0.0
  %218 = vmatprep.subr.mxu0 0.0
  %219 = vmatpush2.msra.mxu0 0.0
  %220 = vmatprep.subr.mxu0 0.0
  %221 = vmatpush2.msra.mxu0 0.0
  %222 = vmatprep.subr.mxu0 0.0
  %223 = vmatpush2.msra.mxu0 0.0
  %224 = vmatprep.subr.mxu0 0.0
  %225 = vmatpush2.msra.mxu0 0.0
  %226 = vmatprep.subr.mxu0 0.0
  %227 = vmatpush2.msra.mxu0 0.0
  %228 = vmatprep.subr.mxu0 0.0
  %229 = vmatpush2.msra.mxu0 0.0
  %230 = vmatprep.subr.mxu0 0.0
  %231 = vmatpush2.msra.mxu0 0.0
  %232 = vmatprep.subr.mxu0 0.0
  %233 = vmatpush2.msra.mxu0 0.0
  %234 = vmatprep.subr.mxu0 0.0
  %235 = vmatpush2.msra.mxu0 0.0
  %236 = vmatprep.mubr.f32.mxu0 0.0
  %237 = vmatmul.mubr.f32.gmra.mxu0 %v161
  %v238 = vpop.f32.mrf.mxu0
  %v239 = vadd.f32 0.0, %v238
  %v240 = vpop.f32.mrf.mxu0
  %241 = vmatprep.mubr.f32.mxu0 0.0
  %242 = vmatmul.mubr.f32.gmra.mxu0 %v164
  %v243 = vpop.f32.mrf.mxu0
  %v244 = vadd.f32 0.0, %v243
  %v245 = vpop.f32.mrf.mxu0
  %246 = vmatprep.mubr.f32.mxu0 0.0
  %247 = vmatmul.mubr.f32.gmra.mxu0 %v167
  %v248 = vpop.f32.mrf.mxu0
  %v249 = vadd.f32 0.0, %v248
  %v250 = vpop.f32.mrf.mxu0
  %251 = vmatprep.mubr.f32.mxu0 0.0
  %252 = vmatmul.mubr.f32.gmra.mxu0 %v170
  %v253 = vpop.f32.mrf.mxu0
  %v254 = vadd.f32 0.0, %v253
  %v255 = vpop.f32.mrf.mxu0
  %256 = vdwg.mxu0
  %v257 = vmul.f32 %v137, %v239
  %v258 = vmul.f32 %v142, %v244
  %v259 = vmul.f32 %v147, %v249
  %v260 = vmul.f32 %v152, %v254
  %v261 = vld [vmem:[%s2] sm:$0xff]
  %v262 = vld [vmem:[%s2 + $0x8] sm:$0xff]
  %v263 = vld [vmem:[%s2 + $0x10] sm:$0xff]
  %v264 = vld [vmem:[%s2 + $0x18] sm:$0xff]
  %vm265 = vcmask 261120
  %v267 = vsel %vm265, %v261, 0
  %v270 = vsel %vm265, %v262, 0
  %v273 = vsel %vm265, %v263, 0
  %v276 = vsel %vm265, %v264, 0
  %278 = vmatprep.subr.mxu0 0.0
  %279 = vmatpush1.msra.mxu0 0.0
  %280 = vmatprep.subr.mxu0 0.0
  %281 = vmatpush1.msra.mxu0 0.0
  %282 = vmatprep.subr.mxu0 0.0
  %283 = vmatpush1.msra.mxu0 0.0
  %284 = vmatprep.subr.mxu0 0.0
  %285 = vmatpush1.msra.mxu0 0.0
  %286 = vmatprep.subr.mxu0 0.0
  %287 = vmatpush1.msra.mxu0 0.0
  %288 = vmatprep.subr.mxu0 0.0
  %289 = vmatpush1.msra.mxu0 0.0
  %290 = vmatprep.subr.mxu0 0.0
  %291 = vmatpush1.msra.mxu0 0.0
  %292 = vmatprep.subr.mxu0 0.0
  %293 = vmatpush1.msra.mxu0 0.0
  %294 = vmatprep.subr.mxu0 0.0
  %295 = vmatpush1.msra.mxu0 0.0
  %296 = vmatprep.subr.mxu0 0.0
  %297 = vmatpush1.msra.mxu0 0.0
  %298 = vmatprep.subr.mxu0 0.0
  %299 = vmatpush1.msra.mxu0 0.0
  %300 = vmatprep.subr.mxu0 0.0
  %301 = vmatpush1.msra.mxu0 0.0
  %302 = vmatprep.subr.mxu0 0.0
  %303 = vmatpush1.msra.mxu0 %v260
  %304 = vmatprep.subr.mxu0 0.0
  %305 = vmatpush1.msra.mxu0 %v259
  %306 = vmatprep.subr.mxu0 0.0
  %307 = vmatpush1.msra.mxu0 %v258
  %308 = vmatprep.subr.mxu0 0.0
  %309 = vmatpush1.msra.mxu0 %v257
  %310 = vmatprep.subr.mxu0 0.0
  %311 = vmatpush2.msra.mxu0 0.0
  %312 = vmatprep.subr.mxu0 0.0
  %313 = vmatpush2.msra.mxu0 0.0
  %314 = vmatprep.subr.mxu0 0.0
  %315 = vmatpush2.msra.mxu0 0.0
  %316 = vmatprep.subr.mxu0 0.0
  %317 = vmatpush2.msra.mxu0 0.0
  %318 = vmatprep.subr.mxu0 0.0
  %319 = vmatpush2.msra.mxu0 0.0
  %320 = vmatprep.subr.mxu0 0.0
  %321 = vmatpush2.msra.mxu0 0.0
  %322 = vmatprep.subr.mxu0 0.0
  %323 = vmatpush2.msra.mxu0 0.0
  %324 = vmatprep.subr.mxu0 0.0
  %325 = vmatpush2.msra.mxu0 0.0
  %326 = vmatprep.subr.mxu0 0.0
  %327 = vmatpush2.msra.mxu0 0.0
  %328 = vmatprep.subr.mxu0 0.0
  %329 = vmatpush2.msra.mxu0 0.0
  %330 = vmatprep.subr.mxu0 0.0
  %331 = vmatpush2.msra.mxu0 0.0
  %332 = vmatprep.subr.mxu0 0.0
  %333 = vmatpush2.msra.mxu0 0.0
  %334 = vmatprep.subr.mxu0 0.0
  %335 = vmatpush2.msra.mxu0 0.0
  %336 = vmatprep.subr.mxu0 0.0
  %337 = vmatpush2.msra.mxu0 0.0
  %338 = vmatprep.subr.mxu0 0.0
  %339 = vmatpush2.msra.mxu0 0.0
  %340 = vmatprep.subr.mxu0 0.0
  %341 = vmatpush2.msra.mxu0 0.0
  %342 = vmatprep.mubr.f32.mxu0 0.0
  %343 = vmatmul.mubr.f32.gmra.mxu0 %v267
  %v344 = vpop.f32.mrf.mxu0
  %v345 = vadd.f32 0.0, %v344
  %v346 = vpop.f32.mrf.mxu0
  %347 = vmatprep.mubr.f32.mxu0 0.0
  %348 = vmatmul.mubr.f32.gmra.mxu0 %v270
  %v349 = vpop.f32.mrf.mxu0
  %v350 = vadd.f32 0.0, %v349
  %v351 = vpop.f32.mrf.mxu0
  %352 = vmatprep.mubr.f32.mxu0 0.0
  %353 = vmatmul.mubr.f32.gmra.mxu0 %v273
  %v354 = vpop.f32.mrf.mxu0
  %v355 = vadd.f32 0.0, %v354
  %v356 = vpop.f32.mrf.mxu0
  %357 = vmatprep.mubr.f32.mxu0 0.0
  %358 = vmatmul.mubr.f32.gmra.mxu0 %v276
  %v359 = vpop.f32.mrf.mxu0
  %v360 = vadd.f32 0.0, %v359
  %v361 = vpop.f32.mrf.mxu0
  %362 = vdwg.mxu0
  %v363 = vld [vmem:[%s5] sm:$0xff]
  %v364 = vld [vmem:[%s5 + $0x8] sm:$0xff]
  %v365 = vld [vmem:[%s5 + $0x10] sm:$0xff]
  %v366 = vld [vmem:[%s5 + $0x18] sm:$0xff]
  %367 = vadd.xlane.f32.xlu0 %v345
  %v368 = vpop.xlane.xlu0 %367
  %369 = vadd.xlane.f32.xlu0 %v350
  %v370 = vpop.xlane.xlu0 %369
  %371 = vadd.xlane.f32.xlu0 %v355
  %v372 = vpop.xlane.xlu0 %371
  %373 = vadd.xlane.f32.xlu0 %v360
  %v374 = vpop.xlane.xlu0 %373
  %v375 = vmul.f32 %v345, %v345
  %v376 = vmul.f32 %v350, %v350
  %v377 = vmul.f32 %v355, %v355
  %v378 = vmul.f32 %v360, %v360
  %379 = vadd.xlane.f32.xlu0 %v375
  %v380 = vpop.xlane.xlu0 %379
  %381 = vadd.xlane.f32.xlu0 %v376
  %v382 = vpop.xlane.xlu0 %381
  %383 = vadd.xlane.f32.xlu0 %v377
  %v384 = vpop.xlane.xlu0 %383
  %385 = vadd.xlane.f32.xlu0 %v378
  %v386 = vpop.xlane.xlu0 %385
  %v387 = vmul.f32 %v368, 0.0078125
  %v388 = vmul.f32 %v370, 0.0078125
  %v389 = vmul.f32 %v372, 0.0078125
  %v390 = vmul.f32 %v374, 0.0078125
  %v391 = vmul.f32 %v380, 0.0078125
  %v392 = vmul.f32 %v382, 0.0078125
  %v393 = vmul.f32 %v384, 0.0078125
  %v394 = vmul.f32 %v386, 0.0078125
  %v395 = vmul.f32 %v387, %v387
  %v396 = vmul.f32 %v388, %v388
  %v397 = vmul.f32 %v389, %v389
  %v398 = vmul.f32 %v390, %v390
  %v399 = vsub.f32 %v391, %v395
  %v400 = vsub.f32 %v392, %v396
  %v401 = vsub.f32 %v393, %v397
  %v402 = vsub.f32 %v394, %v398
  %v403 = vmax.f32 %v399, 0.0
  %v404 = vmax.f32 %v400, 0.0
  %v405 = vmax.f32 %v401, 0.0
  %v406 = vmax.f32 %v402, 0.0
  %v407 = vadd.f32 %v403, 1e-05
  %v408 = vadd.f32 %v404, 1e-05
  %v409 = vadd.f32 %v405, 1e-05
  %v410 = vadd.f32 %v406, 1e-05
  %v411 = vrsqrt.pop %v407
  %v412 = vrsqrt.pop %v408
  %v413 = vrsqrt.pop %v409
  %v414 = vrsqrt.pop %v410
  %v415 = vmul.f32 %v363, %v411
  %v416 = vmul.f32 %v364, %v412
  %v417 = vmul.f32 %v365, %v413
  %v418 = vmul.f32 %v366, %v414
  %v419 = vmul.f32 %v387, %v415
  %v420 = vmul.f32 %v388, %v416
  %v421 = vmul.f32 %v389, %v417
  %v422 = vmul.f32 %v390, %v418
  %427 = vrot.lane.b32.xlu0 %v419, 1
  %v428 = vpop.permute.xlu0 %427
  %429 = vrot.lane.b32.xlu0 %v420, 1
  %v430 = vpop.permute.xlu0 %429
  %431 = vrot.lane.b32.xlu0 %v421, 1
  %v432 = vpop.permute.xlu0 %431
  %433 = vrot.lane.b32.xlu0 %v422, 1
  %v434 = vpop.permute.xlu0 %433
  %v439 = vsub.f32 %v363, %v428
  %v440 = vsub.f32 %v364, %v430
  %v441 = vsub.f32 %v365, %v432
  %v442 = vsub.f32 %v366, %v434
  %444 = vset.pattern.permute.xlu0 0
  %445 = vperm.xlu0 %444, %v415
  %v446 = vpop.permute.xlu0 %445
  %449 = vset.pattern.permute.xlu0 0
  %450 = vperm.xlu0 %449, %v416
  %v451 = vpop.permute.xlu0 %450
  %454 = vset.pattern.permute.xlu0 0
  %455 = vperm.xlu0 %454, %v417
  %v456 = vpop.permute.xlu0 %455
  %459 = vset.pattern.permute.xlu0 0
  %460 = vperm.xlu0 %459, %v418
  %v461 = vpop.permute.xlu0 %460
  %v463 = vmul.f32 %v345, %v446
  %v464 = vmul.f32 %v350, %v451
  %v465 = vmul.f32 %v355, %v456
  %v466 = vmul.f32 %v360, %v461
  %468 = vset.pattern.permute.xlu0 1
  %469 = vperm.xlu0 %468, %v439
  %v470 = vpop.permute.xlu0 %469
  %473 = vset.pattern.permute.xlu0 1
  %474 = vperm.xlu0 %473, %v440
  %v475 = vpop.permute.xlu0 %474
  %478 = vset.pattern.permute.xlu0 1
  %479 = vperm.xlu0 %478, %v441
  %v480 = vpop.permute.xlu0 %479
  %483 = vset.pattern.permute.xlu0 1
  %484 = vperm.xlu0 %483, %v442
  %v485 = vpop.permute.xlu0 %484
  %v487 = vadd.f32 %v463, %v470
  %v488 = vadd.f32 %v464, %v475
  %v489 = vadd.f32 %v465, %v480
  %v490 = vadd.f32 %v466, %v485
  %v491 = vmax.f32 %v487, 0.0
  %v492 = vmax.f32 %v488, 0.0
  %v493 = vmax.f32 %v489, 0.0
  %v494 = vmax.f32 %v490, 0.0
  %v495 = vld [vmem:[%s3] sm:$0xff]
  %v496 = vld [vmem:[%s3 + $0x8] sm:$0xff]
  %v497 = vld [vmem:[%s3 + $0x10] sm:$0xff]
  %v498 = vld [vmem:[%s3 + $0x18] sm:$0xff]
  %v500 = vsel %vm265, %v495, 0
  %v503 = vsel %vm265, %v496, 0
  %v506 = vsel %vm265, %v497, 0
  %v509 = vsel %vm265, %v498, 0
  %511 = vmatprep.subr.mxu0 0.0
  %512 = vmatpush1.msra.mxu0 0.0
  %513 = vmatprep.subr.mxu0 0.0
  %514 = vmatpush1.msra.mxu0 0.0
  %515 = vmatprep.subr.mxu0 0.0
  %516 = vmatpush1.msra.mxu0 0.0
  %517 = vmatprep.subr.mxu0 0.0
  %518 = vmatpush1.msra.mxu0 0.0
  %519 = vmatprep.subr.mxu0 0.0
  %520 = vmatpush1.msra.mxu0 0.0
  %521 = vmatprep.subr.mxu0 0.0
  %522 = vmatpush1.msra.mxu0 0.0
  %523 = vmatprep.subr.mxu0 0.0
  %524 = vmatpush1.msra.mxu0 0.0
  %525 = vmatprep.subr.mxu0 0.0
  %526 = vmatpush1.msra.mxu0 0.0
  %527 = vmatprep.subr.mxu0 0.0
  %528 = vmatpush1.msra.mxu0 0.0
  %529 = vmatprep.subr.mxu0 0.0
  %530 = vmatpush1.msra.mxu0 0.0
  %531 = vmatprep.subr.mxu0 0.0
  %532 = vmatpush1.msra.mxu0 0.0
  %533 = vmatprep.subr.mxu0 0.0
  %534 = vmatpush1.msra.mxu0 0.0
  %535 = vmatprep.subr.mxu0 0.0
  %536 = vmatpush1.msra.mxu0 %v494
  %537 = vmatprep.subr.mxu0 0.0
  %538 = vmatpush1.msra.mxu0 %v493
  %539 = vmatprep.subr.mxu0 0.0
  %540 = vmatpush1.msra.mxu0 %v492
  %541 = vmatprep.subr.mxu0 0.0
  %542 = vmatpush1.msra.mxu0 %v491
  %543 = vmatprep.subr.mxu0 0.0
  %544 = vmatpush2.msra.mxu0 0.0
  %545 = vmatprep.subr.mxu0 0.0
  %546 = vmatpush2.msra.mxu0 0.0
  %547 = vmatprep.subr.mxu0 0.0
  %548 = vmatpush2.msra.mxu0 0.0
  %549 = vmatprep.subr.mxu0 0.0
  %550 = vmatpush2.msra.mxu0 0.0
  %551 = vmatprep.subr.mxu0 0.0
  %552 = vmatpush2.msra.mxu0 0.0
  %553 = vmatprep.subr.mxu0 0.0
  %554 = vmatpush2.msra.mxu0 0.0
  %555 = vmatprep.subr.mxu0 0.0
  %556 = vmatpush2.msra.mxu0 0.0
  %557 = vmatprep.subr.mxu0 0.0
  %558 = vmatpush2.msra.mxu0 0.0
  %559 = vmatprep.subr.mxu0 0.0
  %560 = vmatpush2.msra.mxu0 0.0
  %561 = vmatprep.subr.mxu0 0.0
  %562 = vmatpush2.msra.mxu0 0.0
  %563 = vmatprep.subr.mxu0 0.0
  %564 = vmatpush2.msra.mxu0 0.0
  %565 = vmatprep.subr.mxu0 0.0
  %566 = vmatpush2.msra.mxu0 0.0
  %567 = vmatprep.subr.mxu0 0.0
  %568 = vmatpush2.msra.mxu0 0.0
  %569 = vmatprep.subr.mxu0 0.0
  %570 = vmatpush2.msra.mxu0 0.0
  %571 = vmatprep.subr.mxu0 0.0
  %572 = vmatpush2.msra.mxu0 0.0
  %573 = vmatprep.subr.mxu0 0.0
  %574 = vmatpush2.msra.mxu0 0.0
  %575 = vmatprep.mubr.f32.mxu0 0.0
  %576 = vmatmul.mubr.f32.gmra.mxu0 %v500
  %v577 = vpop.f32.mrf.mxu0
  %v578 = vadd.f32 0.0, %v577
  %v579 = vpop.f32.mrf.mxu0
  %580 = vmatprep.mubr.f32.mxu0 0.0
  %581 = vmatmul.mubr.f32.gmra.mxu0 %v503
  %v582 = vpop.f32.mrf.mxu0
  %v583 = vadd.f32 0.0, %v582
  %v584 = vpop.f32.mrf.mxu0
  %585 = vmatprep.mubr.f32.mxu0 0.0
  %586 = vmatmul.mubr.f32.gmra.mxu0 %v506
  %v587 = vpop.f32.mrf.mxu0
  %v588 = vadd.f32 0.0, %v587
  %v589 = vpop.f32.mrf.mxu0
  %590 = vmatprep.mubr.f32.mxu0 0.0
  %591 = vmatmul.mubr.f32.gmra.mxu0 %v509
  %v592 = vpop.f32.mrf.mxu0
  %v593 = vadd.f32 0.0, %v592
  %v594 = vpop.f32.mrf.mxu0
  %595 = vdwg.mxu0
  %596 = vadd.xlane.f32.xlu0 %v578
  %v597 = vpop.xlane.xlu0 %596
  %598 = vadd.xlane.f32.xlu0 %v583
  %v599 = vpop.xlane.xlu0 %598
  %600 = vadd.xlane.f32.xlu0 %v588
  %v601 = vpop.xlane.xlu0 %600
  %602 = vadd.xlane.f32.xlu0 %v593
  %v603 = vpop.xlane.xlu0 %602
  %v604 = vmul.f32 %v578, %v578
  %v605 = vmul.f32 %v583, %v583
  %v606 = vmul.f32 %v588, %v588
  %v607 = vmul.f32 %v593, %v593
  %608 = vadd.xlane.f32.xlu0 %v604
  %v609 = vpop.xlane.xlu0 %608
  %610 = vadd.xlane.f32.xlu0 %v605
  %v611 = vpop.xlane.xlu0 %610
  %612 = vadd.xlane.f32.xlu0 %v606
  %v613 = vpop.xlane.xlu0 %612
  %614 = vadd.xlane.f32.xlu0 %v607
  %v615 = vpop.xlane.xlu0 %614
  %v616 = vmul.f32 %v597, 0.0078125
  %v617 = vmul.f32 %v599, 0.0078125
  %v618 = vmul.f32 %v601, 0.0078125
  %v619 = vmul.f32 %v603, 0.0078125
  %v620 = vmul.f32 %v609, 0.0078125
  %v621 = vmul.f32 %v611, 0.0078125
  %v622 = vmul.f32 %v613, 0.0078125
  %v623 = vmul.f32 %v615, 0.0078125
  %v624 = vmul.f32 %v616, %v616
  %v625 = vmul.f32 %v617, %v617
  %v626 = vmul.f32 %v618, %v618
  %v627 = vmul.f32 %v619, %v619
  %v628 = vsub.f32 %v620, %v624
  %v629 = vsub.f32 %v621, %v625
  %v630 = vsub.f32 %v622, %v626
  %v631 = vsub.f32 %v623, %v627
  %v632 = vmax.f32 %v628, 0.0
  %v633 = vmax.f32 %v629, 0.0
  %v634 = vmax.f32 %v630, 0.0
  %v635 = vmax.f32 %v631, 0.0
  %v636 = vadd.f32 %v632, 1e-05
  %v637 = vadd.f32 %v633, 1e-05
  %v638 = vadd.f32 %v634, 1e-05
  %v639 = vadd.f32 %v635, 1e-05
  %v640 = vrsqrt.pop %v636
  %v641 = vrsqrt.pop %v637
  %v642 = vrsqrt.pop %v638
  %v643 = vrsqrt.pop %v639
  %v644 = vmul.f32 %v363, %v640
  %v645 = vmul.f32 %v364, %v641
  %v646 = vmul.f32 %v365, %v642
  %v647 = vmul.f32 %v366, %v643
  %v648 = vmul.f32 %v616, %v644
  %v649 = vmul.f32 %v617, %v645
  %v650 = vmul.f32 %v618, %v646
  %v651 = vmul.f32 %v619, %v647
  %656 = vrot.lane.b32.xlu0 %v648, 1
  %v657 = vpop.permute.xlu0 %656
  %658 = vrot.lane.b32.xlu0 %v649, 1
  %v659 = vpop.permute.xlu0 %658
  %660 = vrot.lane.b32.xlu0 %v650, 1
  %v661 = vpop.permute.xlu0 %660
  %662 = vrot.lane.b32.xlu0 %v651, 1
  %v663 = vpop.permute.xlu0 %662
  %v668 = vsub.f32 %v363, %v657
  %v669 = vsub.f32 %v364, %v659
  %v670 = vsub.f32 %v365, %v661
  %v671 = vsub.f32 %v366, %v663
  %673 = vset.pattern.permute.xlu0 2
  %674 = vperm.xlu0 %673, %v644
  %v675 = vpop.permute.xlu0 %674
  %678 = vset.pattern.permute.xlu0 2
  %679 = vperm.xlu0 %678, %v645
  %v680 = vpop.permute.xlu0 %679
  %683 = vset.pattern.permute.xlu0 2
  %684 = vperm.xlu0 %683, %v646
  %v685 = vpop.permute.xlu0 %684
  %688 = vset.pattern.permute.xlu0 2
  %689 = vperm.xlu0 %688, %v647
  %v690 = vpop.permute.xlu0 %689
  %v692 = vmul.f32 %v578, %v675
  %v693 = vmul.f32 %v583, %v680
  %v694 = vmul.f32 %v588, %v685
  %v695 = vmul.f32 %v593, %v690
  %697 = vset.pattern.permute.xlu0 3
  %698 = vperm.xlu0 %697, %v668
  %v699 = vpop.permute.xlu0 %698
  %702 = vset.pattern.permute.xlu0 3
  %703 = vperm.xlu0 %702, %v669
  %v704 = vpop.permute.xlu0 %703
  %707 = vset.pattern.permute.xlu0 3
  %708 = vperm.xlu0 %707, %v670
  %v709 = vpop.permute.xlu0 %708
  %712 = vset.pattern.permute.xlu0 3
  %713 = vperm.xlu0 %712, %v671
  %v714 = vpop.permute.xlu0 %713
  %v716 = vadd.f32 %v692, %v699
  %v717 = vadd.f32 %v693, %v704
  %v718 = vadd.f32 %v694, %v709
  %v719 = vadd.f32 %v695, %v714
  %v720 = vmax.f32 %v716, 0.0
  %v721 = vmax.f32 %v717, 0.0
  %v722 = vmax.f32 %v718, 0.0
  %v723 = vmax.f32 %v719, 0.0
  %v724 = vld [vmem:[%s4] sm:$0xff]
  %v726 = vsel %vm265, %v724, 0
  %728 = vmatprep.subr.mxu0 0.0
  %729 = vmatpush1.msra.mxu0 0.0
  %730 = vmatprep.subr.mxu0 0.0
  %731 = vmatpush1.msra.mxu0 0.0
  %732 = vmatprep.subr.mxu0 0.0
  %733 = vmatpush1.msra.mxu0 0.0
  %734 = vmatprep.subr.mxu0 0.0
  %735 = vmatpush1.msra.mxu0 0.0
  %736 = vmatprep.subr.mxu0 0.0
  %737 = vmatpush1.msra.mxu0 0.0
  %738 = vmatprep.subr.mxu0 0.0
  %739 = vmatpush1.msra.mxu0 0.0
  %740 = vmatprep.subr.mxu0 0.0
  %741 = vmatpush1.msra.mxu0 0.0
  %742 = vmatprep.subr.mxu0 0.0
  %743 = vmatpush1.msra.mxu0 0.0
  %744 = vmatprep.subr.mxu0 0.0
  %745 = vmatpush1.msra.mxu0 0.0
  %746 = vmatprep.subr.mxu0 0.0
  %747 = vmatpush1.msra.mxu0 0.0
  %748 = vmatprep.subr.mxu0 0.0
  %749 = vmatpush1.msra.mxu0 0.0
  %750 = vmatprep.subr.mxu0 0.0
  %751 = vmatpush1.msra.mxu0 0.0
  %752 = vmatprep.subr.mxu0 0.0
  %753 = vmatpush1.msra.mxu0 %v723
  %754 = vmatprep.subr.mxu0 0.0
  %755 = vmatpush1.msra.mxu0 %v722
  %756 = vmatprep.subr.mxu0 0.0
  %757 = vmatpush1.msra.mxu0 %v721
  %758 = vmatprep.subr.mxu0 0.0
  %759 = vmatpush1.msra.mxu0 %v720
  %760 = vmatprep.subr.mxu0 0.0
  %761 = vmatpush2.msra.mxu0 0.0
  %762 = vmatprep.subr.mxu0 0.0
  %763 = vmatpush2.msra.mxu0 0.0
  %764 = vmatprep.subr.mxu0 0.0
  %765 = vmatpush2.msra.mxu0 0.0
  %766 = vmatprep.subr.mxu0 0.0
  %767 = vmatpush2.msra.mxu0 0.0
  %768 = vmatprep.subr.mxu0 0.0
  %769 = vmatpush2.msra.mxu0 0.0
  %770 = vmatprep.subr.mxu0 0.0
  %771 = vmatpush2.msra.mxu0 0.0
  %772 = vmatprep.subr.mxu0 0.0
  %773 = vmatpush2.msra.mxu0 0.0
  %774 = vmatprep.subr.mxu0 0.0
  %775 = vmatpush2.msra.mxu0 0.0
  %776 = vmatprep.subr.mxu0 0.0
  %777 = vmatpush2.msra.mxu0 0.0
  %778 = vmatprep.subr.mxu0 0.0
  %779 = vmatpush2.msra.mxu0 0.0
  %780 = vmatprep.subr.mxu0 0.0
  %781 = vmatpush2.msra.mxu0 0.0
  %782 = vmatprep.subr.mxu0 0.0
  %783 = vmatpush2.msra.mxu0 0.0
  %784 = vmatprep.subr.mxu0 0.0
  %785 = vmatpush2.msra.mxu0 0.0
  %786 = vmatprep.subr.mxu0 0.0
  %787 = vmatpush2.msra.mxu0 0.0
  %788 = vmatprep.subr.mxu0 0.0
  %789 = vmatpush2.msra.mxu0 0.0
  %790 = vmatprep.subr.mxu0 0.0
  %791 = vmatpush2.msra.mxu0 0.0
  %792 = vmatprep.mubr.f32.mxu0 0.0
  %793 = vmatmul.mubr.f32.gmra.mxu0 %v726
  %v794 = vpop.f32.mrf.mxu0
  %v795 = vadd.f32 0.0, %v794
  %v796 = vpop.f32.mrf.mxu0
  %797 = vdwg.mxu0
  %v798 = vld [vmem:[%s5] sm:$0xff]
  %799 = vadd.xlane.f32.xlu0 %v795
  %v800 = vpop.xlane.xlu0 %799
  %v801 = vmul.f32 %v795, %v795
  %802 = vadd.xlane.f32.xlu0 %v801
  %v803 = vpop.xlane.xlu0 %802
  %v804 = vmul.f32 %v800, 0.0078125
  %v805 = vmul.f32 %v803, 0.0078125
  %v806 = vmul.f32 %v804, %v804
  %v807 = vsub.f32 %v805, %v806
  %v808 = vmax.f32 %v807, 0.0
  %v809 = vadd.f32 %v808, 1e-05
  %v810 = vrsqrt.pop %v809
  %v811 = vmul.f32 %v798, %v810
  %v812 = vmul.f32 %v804, %v811
  %814 = vrot.lane.b32.xlu0 %v812, 1
  %v815 = vpop.permute.xlu0 %814
  %v817 = vsub.f32 %v798, %v815
  %819 = vset.pattern.permute.xlu0 4
  %820 = vperm.xlu0 %819, %v811
  %v821 = vpop.permute.xlu0 %820
  %v823 = vmul.f32 %v795, %v821
  %825 = vset.pattern.permute.xlu0 5
  %826 = vperm.xlu0 %825, %v817
  %v827 = vpop.permute.xlu0 %826
  %v829 = vadd.f32 %v823, %v827
  %v830 = vmax.f32 %v829, 0.0
  %832 = vset.pattern.permute.xlu0 6
  %833 = vperm.xlu0 %832, %v798
  %v834 = vpop.permute.xlu0 %833
  %v836 = vmul.f32 %v830, %v834
  %v837 = vrot.slane %v836, 4
  %v838 = vadd.f32 %v836, %v837
  %v839 = vrot.slane %v838, 2
  %v840 = vadd.f32 %v838, %v839
  %v841 = vrot.slane %v840, 1
  %v842 = vadd.f32 %v840, %v841
  %v843 = vld [vmem:[%s5] sm:$0x1]
  %845 = vset.pattern.permute.xlu0 7
  %846 = vperm.xlu0 %845, %v843
  %v847 = vpop.permute.xlu0 %846
  %v849 = vadd.f32 %v842, %v847
  %850 = vst [vmem:[%s6] sm:$0x1] %v849
  // Predicated region
  $region26: #{affinity_forward.1} parent=0 // pred_check
    _
  $region27: #{affinity_forward.1} parent=0 // pred_check_branch
    %852 = sbr.rel (0) target = $region29
  $region28: #{affinity_forward.1} parent=0 // pred_region
    _
  $region29: #{affinity_forward.1} parent=0 // pred_fallthru
    _
  // Predicated region
  $region30: #{affinity_forward.1} parent=0 // pred_check
    _
  $region31: #{affinity_forward.1} parent=0 // pred_check_branch
    %854 = sbr.rel (0) target = $region33
  $region32: #{affinity_forward.1} parent=0 // pred_region
    _
  $region33: #{affinity_forward.1} parent=0 // pred_fallthru
    _

</llo_original>
